<compile_context>
chip_gen: v7x
topology: tpu7x:2x2x1
jax: 0.10.0
libtpu: 0.0.40
codegen_flags: <defaults>
</compile_context>

<pallas_src>
import functools

import jax
import jax.numpy as jnp
from jax import lax
from jax.experimental import pallas as pl
from jax.experimental.pallas import tpu as pltpu

_HALO = 128  # lane-aligned halo width fetched on each side of a length tile


def _dwconv1d_kernel(*refs, kernel_size, pad_left, length, l_tile,
                     has_left, has_right, mask_mode, mask_start):
    """One (channel-tile, length-tile) grid step of the depthwise conv.

    refs layout (static has_left / has_right flags decide which are present):
      [xl_ref], xc_ref, [xr_ref], w_ref, b_ref, o_ref
        xl_ref: (Ct, 128)  input columns just left of this tile
        xc_ref: (Ct, Lt)   current input tile
        xr_ref: (Ct, 128)  input columns just right of this tile
        w_ref : (Ct, K)    per-channel taps
        b_ref : (Ct, 1)    per-channel bias
        o_ref : (Ct, Lt)   output tile
    """
    idx = 0
    xl_ref = None
    if has_left:
        xl_ref = refs[idx]
        idx += 1
    xc_ref = refs[idx]
    idx += 1
    xr_ref = None
    if has_right:
        xr_ref = refs[idx]
        idx += 1
    w_ref, b_ref, o_ref = refs[idx], refs[idx + 1], refs[idx + 2]

    j = pl.program_id(1)

    # Hoisted parameter loads (never reloaded per tap).
    w = w_ref[...].astype(jnp.float32)
    bias = b_ref[...].astype(jnp.float32)

    # Halo strips are always position-masked.  They are only 128 lanes wide
    # (a handful of vregs), and this neutralises both the virtual F.pad zeros
    # (pos < 0 / pos >= L) and garbage from clamped or partial edge blocks.
    xl = xr = None
    if has_left:
        pos_l = (lax.broadcasted_iota(jnp.int32, xl_ref.shape, 1)
                 + (j * l_tile - _HALO))
        xl = jnp.where((pos_l >= 0) & (pos_l < length), xl_ref[...], 0)
    if has_right:
        pos_r = (lax.broadcasted_iota(jnp.int32, xr_ref.shape, 1)
                 + (j + 1) * l_tile)
        xr = jnp.where(pos_r < length, xr_ref[...], 0)

    def compute(xc):
        """K-tap MAC for this tile, given (possibly masked) centre data."""
        parts = []
        if has_left:
            parts.append(xl)
        parts.append(xc)
        if has_right:
            parts.append(xr)
        # Single window [left-halo | centre | right-halo], built once per step
        # in the input dtype (bf16 stays packed).  Width = Lt + 128 * #halos.
        if kernel_size > 1 and len(parts) > 1:
            win = jnp.concatenate(parts, axis=-1)
        else:
            win = xc
        base = _HALO if has_left else 0

        acc = jnp.zeros(o_ref.shape, jnp.float32)
        for k in range(kernel_size):            # static unroll over the taps
            d = k - pad_left                    # this tap reads x[t + d]
            if d == 0:
                tap = xc                        # aligned tap: no slice at all
            else:
                off = base + d                  # 0 <= off <= base + 128
                tap = win[:, off:off + l_tile]  # static (lane-rotate) slice
            acc = acc + tap.astype(jnp.float32) * w[:, k:k + 1]
        return (acc + bias).astype(o_ref.dtype)

    def masked_center():
        pos_c = lax.broadcasted_iota(jnp.int32, xc_ref.shape, 1) + j * l_tile
        return jnp.where(pos_c < length, xc_ref[...], 0)

    if mask_mode == "never":
        # Every centre block is fully inside [0, L): no masking needed.
        o_ref[...] = compute(xc_ref[...])
    elif mask_mode == "always":
        o_ref[...] = compute(masked_center())
    else:  # "edge": only tiles j >= mask_start can contain pos >= L
        @pl.when(j < mask_start)
        def _():
            o_ref[...] = compute(xc_ref[...])

        @pl.when(j >= mask_start)
        def _():
            o_ref[...] = compute(masked_center())


def depthwise_conv1d(x, weight, bias, padding, *, c_tile=128, l_tile=4096):
    """x: (B, C, L); weight: (C, 1, K) (PyTorch depthwise layout); bias: (C,).

    padding = (pad_left, pad_right) zero padding of the length dim (F.pad)
    before a depthwise (groups=C, multiplier 1) Conv1d.
    Returns (B, C, L_out) with L_out = L + pad_l + pad_r - K + 1.
    """
    b, c, l = x.shape
    k = weight.shape[-1]
    assert weight.shape[0] == c and weight.shape[1] == 1, \
        "depthwise (channel multiplier 1) weights expected"
    pad_l, pad_r = padding
    assert pad_l >= 0 and pad_r >= 0, "negative padding not supported"
    l_out = l + pad_l + pad_r - k + 1
    assert l_out > 0, "empty output"
    # TODO(synk): support pad_left / (K-1-pad_left) > 128 by widening the halo.
    assert pad_l <= _HALO and (k - 1 - pad_l) <= _HALO, \
        "halo blocks are 128 wide; need pad_l <= 128 and K-1-pad_l <= 128"

    has_left = pad_l > 0                # some tap reads x[t + d] with d < 0
    has_right = (k - 1 - pad_l) > 0     # some tap reads x[t + d] with d > 0

    # Fold batch into the channel (sublane) dim: every (b, c) row is an
    # independent 1-D conv, and tiny-C configs would otherwise waste most of
    # each sublane group.  (B, C, L) -> (B*C, L) is a free reshape.
    bc = b * c
    x2 = x.reshape(bc, l)
    w2 = jnp.tile(weight.reshape(c, k), (b, 1))       # (B*C, K)
    b2 = jnp.tile(bias.reshape(c, 1), (b, 1))         # (B*C, 1)

    # Length tile: multiple of 128 (lane-dense output blocks), as large as
    # is useful for this input.
    lt = max(_HALO, (l_tile // _HALO) * _HALO)
    lt = min(lt, (l // _HALO) * _HALO, (l_out // _HALO) * _HALO)
    if lt == 0:                  # tiny inputs: single 128-wide tile
        lt = _HALO
    # Channel tile: sublane dim; multiple of 8 unless it is the whole dim.
    ct = min(c_tile, bc)
    if ct < bc:
        ct = max(8, (ct // 8) * 8)

    # Tiny-input hedge (L < 128): zero-pad so every block dim <= array dim.
    x_eff, l_eff = x2, l
    if l_eff < lt:
        x_eff = jnp.pad(x2, ((0, 0), (0, lt - l_eff)))
        l_eff = lt

    n_bc = pl.cdiv(bc, ct)
    n_j = pl.cdiv(l_out, lt)
    l_out_alloc = n_j * lt           # full, lane-dense output blocks
    n_xb = pl.cdiv(l_eff, lt)        # number of Lt-wide centre blocks in x
    n_hb = pl.cdiv(l_eff, _HALO)     # number of 128-wide halo blocks in x
    ratio = lt // _HALO

    # Tiles j >= mask_start can see positions >= L in their centre block
    # (virtual right padding / partial or clamped blocks); tiles below it
    # never can, so they skip the centre mask entirely.
    mask_start = l // lt
    if mask_start <= 0:
        mask_mode = "always"
    elif mask_start >= n_j:
        mask_mode = "never"
    else:
        mask_mode = "edge"

    kernel = functools.partial(
        _dwconv1d_kernel, kernel_size=k, pad_left=pad_l, length=l, l_tile=lt,
        has_left=has_left, has_right=has_right, mask_mode=mask_mode,
        mask_start=mask_start)

    in_specs = []
    operands = []
    if has_left:
        # 128 columns just left of the tile (clamped at the edges; anything
        # invalid is masked to zero inside the kernel).
        in_specs.append(pl.BlockSpec(
            (ct, _HALO),
            lambda ci, j: (ci, jnp.clip(j * ratio - 1, 0, n_hb - 1))))
        operands.append(x_eff)
    # Current length tile.
    in_specs.append(pl.BlockSpec(
        (ct, lt), lambda ci, j: (ci, jnp.minimum(j, n_xb - 1))))
    operands.append(x_eff)
    if has_right:
        # 128 columns just right of the tile.
        in_specs.append(pl.BlockSpec(
            (ct, _HALO),
            lambda ci, j: (ci, jnp.minimum((j + 1) * ratio, n_hb - 1))))
        operands.append(x_eff)
    in_specs.append(pl.BlockSpec((ct, k), lambda ci, j: (ci, 0)))
    operands.append(w2)
    in_specs.append(pl.BlockSpec((ct, 1), lambda ci, j: (ci, 0)))
    operands.append(b2)

    out = pl.pallas_call(
        kernel,
        out_shape=jax.ShapeDtypeStruct((bc, l_out_alloc), x.dtype),
        grid_spec=pltpu.PrefetchScalarGridSpec(
            num_scalar_prefetch=0,
            grid=(n_bc, n_j),
            in_specs=in_specs,
            out_specs=pl.BlockSpec((ct, lt), lambda ci, j: (ci, j)),
        ),
        compiler_params=pltpu.CompilerParams(
            # Both grid axes are independent -> fully parallel (v7x 2-TC
            # sharding even at B=1 thanks to the folded B*C axis).
            dimension_semantics=("parallel", "parallel"),
            # Few-MiB double-buffered tiles + in-kernel temporaries; 32 MiB
            # fits comfortably on v5e/v6e and within v7x's 64 MiB VMEM.
            vmem_limit_bytes=32 * 1024 * 1024),
    )(*operands)

    if l_out_alloc != l_out:
        out = out[:, :l_out]
    return out.reshape(b, c, l_out)


def _reference(x, weight, bias, padding):
    """Pure-JAX reference matching F.pad + nn.Conv1d(groups=C)."""
    pad_l, pad_r = padding
    x_pad = jnp.pad(x, ((0, 0), (0, 0), (pad_l, pad_r)))
    c = x.shape[1]
    y = lax.conv_general_dilated(
        x_pad, weight, window_strides=(1,), padding="VALID",
        feature_group_count=c,
        dimension_numbers=("NCH", "OIH", "NCH"))
    return y + bias.reshape(1, c, 1)


if __name__ == "__main__":
    def _check(batch, channels, length, ksize, padding, **kw):
        key = jax.random.PRNGKey(0)
        kx, kwt, kb = jax.random.split(key, 3)
        x = jax.random.normal(kx, (batch, channels, length), dtype=jnp.float32)
        weight = jax.random.normal(kwt, (channels, 1, ksize),
                                   dtype=jnp.float32) * 0.1
        bias = jax.random.normal(kb, (channels,), dtype=jnp.float32) * 0.1
        y = jax.block_until_ready(
            depthwise_conv1d(x, weight, bias, padding, **kw))
        y_ref = _reference(x, weight, bias, padding)
        assert y.shape == y_ref.shape, (y.shape, y_ref.shape)
        err = float(jnp.max(jnp.abs(y - y_ref)))
        assert err < 1e-4, err

    # Module-consistent small case: B=2, C=4, L=16, K=3, causal padding
    # (left halo only, batch folded into channels, "always"-mask path).
    _check(2, 4, 16, 3, (2, 0))
    # Symmetric padding, both halos, single length tile, clamped right halo.
    _check(2, 8, 512, 5, (2, 2))
    # Multi-tile length: exercises halo stitching across length tiles.
    _check(1, 4, 512, 3, (1, 1), l_tile=128)
    # Length not a multiple of the tile: exercises the edge-masked path and
    # partial input blocks.
    _check(1, 4, 300, 3, (2, 0), l_tile=256)

    print("KERNEL_OK")
</pallas_src>

<mosaic_0001>
module attributes {stable_mosaic.version = 11 : i64} {
  func.func @_dwconv1d_kernel(%arg0: i32, %arg1: i32, %arg2: memref<8x128xf32, #tpu.memory_space<vmem>>, %arg3: memref<8x128xf32, #tpu.memory_space<vmem>>, %arg4: memref<8x3xf32, #tpu.memory_space<vmem>>, %arg5: memref<8x1xf32, #tpu.memory_space<vmem>>, %arg6: memref<8x128xf32, #tpu.memory_space<vmem>>) attributes {dimension_semantics = [#tpu.dimension_semantics<parallel>, #tpu.dimension_semantics<parallel>], iteration_bounds = array<i64: 1, 1>, scalar_prefetch = 0 : i64, scratch_operands = 0 : i64, tpu.core_type = #tpu.core_type<tc>, window_params = [{transform_indices = @transform_0, window_bounds = array<i64: 8, 128>}, {transform_indices = @transform_1, window_bounds = array<i64: 8, 128>}, {transform_indices = @transform_2, window_bounds = array<i64: 8, 3>}, {transform_indices = @transform_3, window_bounds = array<i64: 8, 1>}, {transform_indices = @transform_4, window_bounds = array<i64: 8, 128>}]} {
    %c0 = arith.constant 0 : index
    %c0_0 = arith.constant 0 : index
    %0 = vector.load %arg4[%c0, %c0_0] : memref<8x3xf32, #tpu.memory_space<vmem>>, vector<8x3xf32>
    %c0_1 = arith.constant 0 : index
    %c0_2 = arith.constant 0 : index
    %1 = vector.load %arg5[%c0_1, %c0_2] : memref<8x1xf32, #tpu.memory_space<vmem>>, vector<8x1xf32>
    %2 = tpu.iota {dimensions = array<i32: 1>} : vector<8x128xi32>
    %c128_i32 = arith.constant 128 : i32
    %3 = arith.muli %arg1, %c128_i32 : i32
    %c128_i32_3 = arith.constant 128 : i32
    %4 = arith.subi %3, %c128_i32_3 : i32
    %5 = vector.broadcast %4 : i32 to vector<8x128xi32>
    %6 = arith.addi %2, %5 : vector<8x128xi32>
    %c0_i32 = arith.constant 0 : i32
    %7 = vector.broadcast %c0_i32 : i32 to vector<8x128xi32>
    %8 = arith.cmpi sge, %6, %7 : vector<8x128xi32>
    %c16_i32 = arith.constant 16 : i32
    %9 = vector.broadcast %c16_i32 : i32 to vector<8x128xi32>
    %10 = arith.cmpi slt, %6, %9 : vector<8x128xi32>
    %11 = arith.andi %8, %10 : vector<8x128xi1>
    %c0_4 = arith.constant 0 : index
    %c0_5 = arith.constant 0 : index
    %12 = vector.load %arg2[%c0_4, %c0_5] : memref<8x128xf32, #tpu.memory_space<vmem>>, vector<8x128xf32>
    %c0_i32_6 = arith.constant 0 : i32
    %13 = arith.sitofp %c0_i32_6 : i32 to f32
    %14 = vector.broadcast %13 : f32 to vector<8x128xf32>
    %15 = arith.select %11, %12, %14 : vector<8x128xi1>, vector<8x128xf32>
    %16 = tpu.iota {dimensions = array<i32: 1>} : vector<8x128xi32>
    %c128_i32_7 = arith.constant 128 : i32
    %17 = arith.muli %arg1, %c128_i32_7 : i32
    %18 = vector.broadcast %17 : i32 to vector<8x128xi32>
    %19 = arith.addi %16, %18 : vector<8x128xi32>
    %c16_i32_8 = arith.constant 16 : i32
    %20 = vector.broadcast %c16_i32_8 : i32 to vector<8x128xi32>
    %21 = arith.cmpi slt, %19, %20 : vector<8x128xi32>
    %c0_9 = arith.constant 0 : index
    %c0_10 = arith.constant 0 : index
    %22 = vector.load %arg3[%c0_9, %c0_10] : memref<8x128xf32, #tpu.memory_space<vmem>>, vector<8x128xf32>
    %c0_i32_11 = arith.constant 0 : i32
    %23 = arith.sitofp %c0_i32_11 : i32 to f32
    %24 = vector.broadcast %23 : f32 to vector<8x128xf32>
    %25 = arith.select %21, %22, %24 : vector<8x128xi1>, vector<8x128xf32>
    %26 = tpu.concatenate %15, %25 in 1 : vector<8x128xf32>, vector<8x128xf32> -> vector<8x256xf32>
    %cst = arith.constant 0.000000e+00 : f32
    %27 = vector.broadcast %cst : f32 to vector<8x128xf32>
    %28 = vector.extract_strided_slice %26 {offsets = [0, 126], sizes = [8, 128], strides = [1, 1]} : vector<8x256xf32> to vector<8x128xf32>
    %29 = vector.extract_strided_slice %0 {offsets = [0, 0], sizes = [8, 1], strides = [1, 1]} : vector<8x3xf32> to vector<8x1xf32>
    %30 = vector.broadcast %29 : vector<8x1xf32> to vector<8x128xf32>
    %31 = arith.mulf %28, %30 : vector<8x128xf32>
    %32 = arith.addf %27, %31 : vector<8x128xf32>
    %33 = vector.extract_strided_slice %26 {offsets = [0, 127], sizes = [8, 128], strides = [1, 1]} : vector<8x256xf32> to vector<8x128xf32>
    %34 = vector.extract_strided_slice %0 {offsets = [0, 1], sizes = [8, 1], strides = [1, 1]} : vector<8x3xf32> to vector<8x1xf32>
    %35 = vector.broadcast %34 : vector<8x1xf32> to vector<8x128xf32>
    %36 = arith.mulf %33, %35 : vector<8x128xf32>
    %37 = arith.addf %32, %36 : vector<8x128xf32>
    %38 = vector.extract_strided_slice %0 {offsets = [0, 2], sizes = [8, 1], strides = [1, 1]} : vector<8x3xf32> to vector<8x1xf32>
    %39 = vector.broadcast %38 : vector<8x1xf32> to vector<8x128xf32>
    %40 = arith.mulf %25, %39 : vector<8x128xf32>
    %41 = arith.addf %37, %40 : vector<8x128xf32>
    %42 = vector.broadcast %1 : vector<8x1xf32> to vector<8x128xf32>
    %43 = arith.addf %41, %42 : vector<8x128xf32>
    %c0_12 = arith.constant 0 : index
    %c0_13 = arith.constant 0 : index
    %44 = vector.load %arg6[%c0_12, %c0_13] : memref<8x128xf32, #tpu.memory_space<vmem>>, vector<8x128xf32>
    tpu.vector_store %arg6[%c0_12, %c0_13], %43 {strides = array<i32>} : memref<8x128xf32, #tpu.memory_space<vmem>>, vector<8x128xf32>,
    return
  }
  func.func @transform_0(%arg0: i32, %arg1: i32) -> (i32, i32) {
    %c1_i32 = arith.constant 1 : i32
    %0 = arith.muli %arg1, %c1_i32 : i32
    %c1_i32_0 = arith.constant 1 : i32
    %1 = arith.subi %0, %c1_i32_0 : i32
    %c0_i32 = arith.constant 0 : i32
    %c0_i32_1 = arith.constant 0 : i32
    %2 = arith.maxsi %c0_i32, %1 : i32
    %3 = arith.minsi %c0_i32_1, %2 : i32
    %c0_i32_2 = arith.constant 0 : i32
    return %arg0, %3 : i32, i32
  }
  func.func @transform_1(%arg0: i32, %arg1: i32) -> (i32, i32) {
    %c0_i32 = arith.constant 0 : i32
    %0 = arith.minsi %arg1, %c0_i32 : i32
    %c0_i32_0 = arith.constant 0 : i32
    return %arg0, %0 : i32, i32
  }
  func.func @transform_2(%arg0: i32, %arg1: i32) -> (i32, i32) {
    %c0_i32 = arith.constant 0 : i32
    %c0_i32_0 = arith.constant 0 : i32
    return %arg0, %c0_i32 : i32, i32
  }
  func.func @transform_3(%arg0: i32, %arg1: i32) -> (i32, i32) {
    %c0_i32 = arith.constant 0 : i32
    %c0_i32_0 = arith.constant 0 : i32
    return %arg0, %c0_i32 : i32, i32
  }
  func.func @transform_4(%arg0: i32, %arg1: i32) -> (i32, i32) {
    %c0_i32 = arith.constant 0 : i32
    return %arg0, %arg1 : i32, i32
  }
}

</mosaic_0001>

<llo_original>
// kernel: tpu_custom_call.1
$region0: #{tpu_custom_call.1}
  #allocation0 [shape = 'u32[]', space=smem, size = 0x4, offset = 0x4, fixed_abs, tag = 'smem constant byte address 0x4 - core index']
  #allocation1 [shape = 'u32[144,128]{1,0:T(1,128)}', space=vmem, size = 0x12000, scoped, tag = 'internal scratch']
  %s0 = inlined_call_operand.vmem [shape: f32[8,128], index: 0, kind: input, shape index: {}]
  %s1 = inlined_call_operand.vmem [shape: f32[8,128], index: 1, kind: input, shape index: {}]
  %s2 = inlined_call_operand.vmem [shape: f32[8,3], index: 2, kind: input, shape index: {}]
  %s3 = inlined_call_operand.vmem [shape: f32[8,1], index: 3, kind: input, shape index: {}]
  %s4 = inlined_call_operand.hbm [shape: f32[8,128], index: 4, kind: output, shape index: {}]
  %s5 = sld [smem:[#allocation0]]
  $region26: #{tpu_custom_call.1} parent=0
    _
  %s7 = ssub.s32 1, %s5
  %s8 = scalar_select 0, %s7, %s5
  $region1: #{tpu_custom_call.1} parent=0
    #allocation2 [shape = 'u8[4096]{0}', space=vmem, size = 0x1000, scoped, tag = 'output window, operand 0, single buffered']
    #allocation3 [shape = 's32[1]{0}', space=sflag, size = 0x4, scoped, tag = 'scoped memory for tpu_custom_call.1']
    %9 = vsyncpa [#allocation3], 0
    // Predicated region
    $region2: #{tpu_custom_call.1} parent=1 // pred_check
      _
    $region3: #{tpu_custom_call.1} parent=1 // pred_check_branch
      %11 = sbr.rel (0) target = $region5
    $region4: #{tpu_custom_call.1} parent=1 // pred_region
      %s12 = ssub.s32 0, 1
      %p13 = scmp.gt.s32.totalorder %s12, 0
      %s14 = scalar_select %p13, %s12, 0
      %p15 = scmp.lt.s32.totalorder %s14, 0
      %s16 = scalar_select %p15, %s14, 0
      %p17 = scmp.lt.s32.totalorder %s16, 0
      %s18 = scalar_select %p17, %s16, 0
      %s19 = smul.addr %s18, 8
      %s20 = scalar_lea.vmem %s0, %s19
      %s21 = ssub.s32 0, 1
      %p22 = scmp.gt.s32.totalorder %s21, 0
      %s23 = scalar_select %p22, %s21, 0
      %p24 = scmp.lt.s32.totalorder %s23, 0
      %s25 = scalar_select %p24, %s23, 0
    $region5: #{tpu_custom_call.1} parent=1 // pred_fallthru
      _
    // Predicated region
    $region6: #{tpu_custom_call.1} parent=1 // pred_check
      _
    $region7: #{tpu_custom_call.1} parent=1 // pred_check_branch
      %27 = sbr.rel (0) target = $region9
    $region8: #{tpu_custom_call.1} parent=1 // pred_region
      _
    $region9: #{tpu_custom_call.1} parent=1 // pred_fallthru
      _
    // Predicated region
    $region10: #{tpu_custom_call.1} parent=1 // pred_check
      _
    $region11: #{tpu_custom_call.1} parent=1 // pred_check_branch
      %29 = sbr.rel (0) target = $region13
    $region12: #{tpu_custom_call.1} parent=1 // pred_region
      _
    $region13: #{tpu_custom_call.1} parent=1 // pred_fallthru
      _
    // Predicated region
    $region14: #{tpu_custom_call.1} parent=1 // pred_check
      _
    $region15: #{tpu_custom_call.1} parent=1 // pred_check_branch
      %31 = sbr.rel (0) target = $region17
    $region16: #{tpu_custom_call.1} parent=1 // pred_region
      _
    $region17: #{tpu_custom_call.1} parent=1 // pred_fallthru
      _
    %s32 = ssub.s32 0, 1
    %p33 = scmp.gt.s32.totalorder %s32, 0
    %s34 = scalar_select %p33, %s32, 0
    %p35 = scmp.lt.s32.totalorder %s34, 0
    %s36 = scalar_select %p35, %s34, 0
    %p37 = scmp.lt.s32.totalorder %s36, 0
    %s38 = scalar_select %p37, %s36, 0
    %s39 = smul.addr %s38, 8
    %s40 = scalar_lea.vmem %s0, %s39
    %s41 = ssub.s32 0, 1
    %p42 = scmp.gt.s32.totalorder %s41, 0
    %s43 = scalar_select %p42, %s41, 0
    %p44 = scmp.lt.s32.totalorder %s43, 0
    %s45 = scalar_select %p44, %s43, 0
    %p46 = scmp.lt.s32.totalorder %s45, 0
    %s47 = scalar_select %p46, %s45, 0
    %s48 = smul.addr %s47, 8
    %s49 = scalar_lea.vmem %s0, %s48
    %s50 = ssub.s32 0, 1
    %p51 = scmp.gt.s32.totalorder %s50, 0
    %s52 = scalar_select %p51, %s50, 0
    %p53 = scmp.lt.s32.totalorder %s52, 0
    %s54 = scalar_select %p53, %s52, 0
    %v55 = vld [vmem:[%s2] sm:$0xff]
    %v56 = vld [vmem:[%s3] sm:$0xff]
    %v57 = vlaneseq
    %v58 = vand.u32 %v57, 127
    %s59 = smul.u32 0, 128
    %s60 = ssub.s32 %s59, 128
    %v61 = vstv %s60
    %v62 = vadd.s32 %v58, %v61
    %vm63 = vcmp.ge.s32.totalorder %v62, 0
    %vm64 = vcmp.lt.s32.totalorder %v62, 16
    %vm65 = vmand %vm63, %vm64
    %v66 = vld [vmem:[%s49] sm:$0xff]
    %v67 = vsel %vm65, %v66, 0.0
    %v68 = vstv %s59
    %v69 = vadd.s32 %v58, %v68
    %vm70 = vcmp.lt.s32.totalorder %v69, 16
    %v71 = vld [vmem:[%s1] sm:$0xff]
    %v72 = vsel %vm70, %v71, 0.0
    %74 = vset.pattern.permute.xlu0 0
    %75 = vperm.xlu0 %74, %v55
    %v76 = vpop.permute.xlu0 %75
    %v78 = vmul.f32 %v67, %v76
    %v79 = vmul.f32 %v72, %v76
    %v80 = vadd.f32 %v78, 0.0
    %v81 = vadd.f32 %v79, 0.0
    %82 = vset.pattern.permute.xlu0 1
    %83 = vperm.xlu0 %82, %v55
    %v84 = vpop.permute.xlu0 %83
    %v86 = vmul.f32 %v67, %v84
    %v87 = vmul.f32 %v72, %v84
    %90 = vrot.lane.b32.xlu0 %v86, 127
    %v91 = vpop.permute.xlu0 %90
    %92 = vrot.lane.b32.xlu0 %v87, 127
    %v93 = vpop.permute.xlu0 %92
    %vm94 = vcmask 1039360
    %v95 = vsel %vm94, %v91, %v93
    %v98 = vadd.f32 %v80, %v95
    %v99 = vadd.f32 %v81, %v93
    %100 = vset.pattern.permute.xlu0 2
    %101 = vperm.xlu0 %100, %v55
    %v102 = vpop.permute.xlu0 %101
    %v104 = vmul.f32 %v72, %v102
    %106 = vrot.lane.b32.xlu0 %v104, 126
    %v107 = vpop.permute.xlu0 %106
    %v109 = vadd.f32 %v98, %v107
    %v110 = vadd.f32 %v99, %v107
    %112 = vset.pattern.permute.xlu0 0
    %113 = vperm.xlu0 %112, %v56
    %v114 = vpop.permute.xlu0 %113
    %v116 = vadd.f32 %v109, %v114
    %v117 = vadd.f32 %v110, %v114
    %120 = vrot.lane.b32.xlu0 %v116, 2
    %v121 = vpop.permute.xlu0 %120
    %122 = vrot.lane.b32.xlu0 %v117, 2
    %v123 = vpop.permute.xlu0 %122
    %vm124 = vcmask 15360
    %v125 = vsel %vm124, %v121, %v123
    %127 = vst [vmem:[#allocation2] sm:$0xff] %v125
    // Predicated region
    $region18: #{tpu_custom_call.1} parent=1 // pred_check
      _
    $region19: #{tpu_custom_call.1} parent=1 // pred_check_branch
      %129 = sbr.rel (0) target = $region21
    $region20: #{tpu_custom_call.1} parent=1 // pred_region
      %s131 = ssub.s32 128, 128
      %132 = vsyncadd [#allocation3], %s131
      %s134 = sshll.u32 [#allocation2], 4
      %s135 = int_to_ptr.vmem [resolvable:$true] %s134
      %137 = dma.vmem_to_hbm [thread:$0]  %s135, 128, %s4, [#allocation3]
    $region21: #{tpu_custom_call.1} parent=1 // pred_fallthru
      _
    // Predicated region
    $region22: #{tpu_custom_call.1} parent=1 // pred_check
      _
    $region23: #{tpu_custom_call.1} parent=1 // pred_check_branch
      %139 = sbr.rel (0) target = $region25
    $region24: #{tpu_custom_call.1} parent=1 // pred_region
      %140 = dma.done [#allocation3], 128
    $region25: #{tpu_custom_call.1} parent=1 // pred_fallthru
      _
    %141 = vsyncpa [#allocation3], 1

</llo_original>
